<compile_context>
chip_gen: v5e
topology: v5e:2x2
jax: 0.10.0
libtpu: 0.0.40
codegen_flags: <defaults>
</compile_context>

<pallas_src>
import functools

import jax
import jax.numpy as jnp
from jax import lax
from jax.experimental import pallas as pl
from jax.experimental.pallas import tpu as pltpu


def _global_disc_kernel(offs, n_in, k0, k1, e_sz, inter,
                        e_ref, m_ref, w_ref, b_ref, out_ref):
    """Whole forward pass for one small batch, single grid point.

    w_ref : bf16 weight slab (rows = packed segments, see wrapper)
    b_ref : f32 bias slab (row 0: conv0 bias tiled, 1: conv1 bias tiled,
            2: l0 bias, 3: l1 bias, 4: l2 bias)
    """
    f32, bf16 = jnp.float32, jnp.bfloat16
    o_w0, o_w1, o_l0e, o_l0c, o_l1, o_l2 = offs

    # --- static slab slices (cheap, fully static) ---------------------------
    w0 = w_ref[o_w0:o_w0 + n_in, :k0]          # (C0*H*W,  C1*H1*W1)
    w1 = w_ref[o_w1:o_w1 + k0, :k1]            # (C1*H1*W1, C2*H2*W2)
    wl0e = w_ref[o_l0e:o_l0e + e_sz, :inter]   # (E_SZ, INTER)
    wl0c = w_ref[o_l0c:o_l0c + k1, :inter]     # (C2*H2*W2, INTER)
    wl1 = w_ref[o_l1:o_l1 + inter, :inter]     # (INTER, INTER)
    wl2 = w_ref[o_l2:o_l2 + inter, :1]         # (INTER, 1)
    b0 = b_ref[0:1, :k0]
    b1 = b_ref[1:2, :k1]
    bl0 = b_ref[2:3, :inter]
    bl1 = b_ref[3:4, :inter]
    bl2 = b_ref[4:5, :1]

    # --- conv c0 (unfolded) + bias + ReLU; f32 accumulation -----------------
    a0 = jnp.dot(m_ref[...].astype(bf16), w0, preferred_element_type=f32) + b0
    a0 = jnp.maximum(a0, 0.0)                                   # (B, C1*H1*W1)

    # --- conv c1 (unfolded) + bias: result == PyTorch C.view(B, -1) ---------
    c = jnp.dot(a0.astype(bf16), w1, preferred_element_type=f32) + b1

    # --- l0 on cat([E, C]) as two dots (no concat needed) -------------------
    l0 = (jnp.dot(e_ref[...].astype(bf16), wl0e, preferred_element_type=f32)
          + jnp.dot(c.astype(bf16), wl0c, preferred_element_type=f32) + bl0)
    h0 = jnp.maximum(l0, 0.0)

    # --- l1 (ReLU) and l2 ----------------------------------------------------
    h1 = jnp.maximum(
        jnp.dot(h0.astype(bf16), wl1, preferred_element_type=f32) + bl1, 0.0)
    out_ref[...] = (jnp.dot(h1.astype(bf16), wl2, preferred_element_type=f32)
                    + bl2)


def _round_up(x, m):
    return (x + m - 1) // m * m


def _conv_as_matrix(w, h_in, w_in):
    """Dense (unfolded/Toeplitz) matrix of a stride-1 VALID conv.

    NCHW flatten on both sides: out_flat = in_flat @ dense.
    Pure placement of the conv-weight values (no arithmetic) — one-time
    parameter layout plumbing done in the wrapper.
    """
    o_ch, i_ch, kh, kw = w.shape
    h_out, w_out = h_in - kh + 1, w_in - kw + 1
    o = jnp.arange(o_ch).reshape(o_ch, 1, 1, 1, 1, 1)
    i = jnp.arange(i_ch).reshape(1, i_ch, 1, 1, 1, 1)
    dy = jnp.arange(kh).reshape(1, 1, kh, 1, 1, 1)
    dx = jnp.arange(kw).reshape(1, 1, 1, kw, 1, 1)
    y = jnp.arange(h_out).reshape(1, 1, 1, 1, h_out, 1)
    x = jnp.arange(w_out).reshape(1, 1, 1, 1, 1, w_out)
    full = (o_ch, i_ch, kh, kw, h_out, w_out)
    rows = jnp.broadcast_to(
        i * (h_in * w_in) + (y + dy) * w_in + (x + dx), full).ravel()
    cols = jnp.broadcast_to(
        o * (h_out * w_out) + y * w_out + x, full).ravel()
    vals = jnp.broadcast_to(w.reshape(o_ch, i_ch, kh, kw, 1, 1), full).ravel()
    dense = jnp.zeros((i_ch * h_in * w_in, o_ch * h_out * w_out), w.dtype)
    return dense.at[rows, cols].set(vals)


def global_discriminator_pallas(E, M_nchw, params, inter_ch):
    """params are in PyTorch layouts; the wrapper only does one-time layout."""
    B, C0, H, W = M_nchw.shape
    E_SZ = E.shape[1]
    (w0_t, b0_t, w1_t, b1_t,
     wl0_t, bl0_t, wl1_t, bl1_t, wl2_t, bl2_t) = params
    C1, C2 = w0_t.shape[0], w1_t.shape[0]
    H1, W1 = H - 2, W - 2
    H2, W2 = H1 - 2, W1 - 2
    N_IN = C0 * H * W
    K0 = C1 * H1 * W1
    K1 = C2 * H2 * W2
    INTER = inter_ch
    f32, bf16 = jnp.float32, jnp.bfloat16

    # ---- one-time parameter layout: unfold convs, pack two slabs -----------
    w0_big = _conv_as_matrix(w0_t, H, W)          # (N_IN, K0)
    w1_big = _conv_as_matrix(w1_t, H1, W1)        # (K0, K1)
    wl0e = wl0_t[:, :E_SZ].T                      # (E_SZ, INTER)
    wl0c = wl0_t[:, E_SZ:].T                      # (K1, INTER) — NCHW order already
    wl1 = wl1_t.T                                 # (INTER, INTER)
    wl2 = wl2_t.T                                 # (INTER, 1)

    lanes = max(K0, K1, INTER, E_SZ)
    segs = [w0_big, w1_big, wl0e, wl0c, wl1, wl2]
    offs, r = [], 0
    for s in segs:                                # 8-sublane-aligned segments
        offs.append(r)
        r = _round_up(r + s.shape[0], 8)
    w_slab = jnp.zeros((r, lanes), f32)
    for off, s in zip(offs, segs):
        w_slab = w_slab.at[off:off + s.shape[0], :s.shape[1]].set(s)
    w_slab = w_slab.astype(bf16)                  # bf16 MXU operands

    b_slab = jnp.zeros((5, lanes), f32)           # elementwise stays f32 (v5e)
    b_slab = b_slab.at[0, :K0].set(jnp.repeat(b0_t, H1 * W1))
    b_slab = b_slab.at[1, :K1].set(jnp.repeat(b1_t, H2 * W2))
    b_slab = b_slab.at[2, :INTER].set(bl0_t)
    b_slab = b_slab.at[3, :INTER].set(bl1_t)
    b_slab = b_slab.at[4, :1].set(bl2_t)

    m_flat = M_nchw.reshape(B, N_IN)              # NCHW flatten (PyTorch order)

    kernel = functools.partial(_global_disc_kernel,
                               tuple(offs), N_IN, K0, K1, E_SZ, INTER)
    vmem = pl.BlockSpec(memory_space=pltpu.MemorySpace.VMEM)

    return pl.pallas_call(
        kernel,
        out_shape=jax.ShapeDtypeStruct((B, 1), f32),
        in_specs=[vmem] * 4,
        out_specs=vmem,
    )(E, m_flat, w_slab, b_slab)


def global_discriminator_ref(E, M_nchw, params):
    """Pure-JAX reference reproducing the PyTorch forward (NCHW, f32)."""
    w0_t, b0_t, w1_t, b1_t, wl0_t, bl0_t, wl1_t, bl1_t, wl2_t, bl2_t = params
    dn = ('NCHW', 'OIHW', 'NCHW')
    c = lax.conv_general_dilated(M_nchw, w0_t, (1, 1), 'VALID',
                                 dimension_numbers=dn)
    c = jax.nn.relu(c + b0_t.reshape(1, -1, 1, 1))
    c = lax.conv_general_dilated(c, w1_t, (1, 1), 'VALID',
                                 dimension_numbers=dn)
    c = c + b1_t.reshape(1, -1, 1, 1)
    cf = c.reshape(E.shape[0], -1)                # NCHW flatten
    h = jnp.concatenate([E, cf], axis=1)
    h = jax.nn.relu(h @ wl0_t.T + bl0_t)
    h = jax.nn.relu(h @ wl1_t.T + bl1_t)
    return h @ wl2_t.T + bl2_t


if __name__ == "__main__":
    # Small shapes consistent with the module:
    #   M_ch_num = 8, M_shape = (8, 8), E_sz = 16, inter_ch = 32, batch = 2
    B, C0, H, W = 2, 8, 8, 8
    E_SZ, INTER = 16, 32
    C1, C2 = C0 // 2, C0 // 4
    H2, W2 = H - 4, W - 4
    IN_FEAT = C2 * H2 * W2 + E_SZ

    key = jax.random.PRNGKey(0)
    ks = jax.random.split(key, 12)
    f32 = jnp.float32

    E = jax.random.normal(ks[0], (B, E_SZ), f32)
    M = jax.random.normal(ks[1], (B, C0, H, W), f32)           # NCHW like PyTorch

    # Deterministic synthetic parameters (PyTorch layouts).
    params = (
        jax.random.normal(ks[2], (C1, C0, 3, 3), f32) * 0.1,   # c0.weight
        jax.random.normal(ks[3], (C1,), f32) * 0.1,            # c0.bias
        jax.random.normal(ks[4], (C2, C1, 3, 3), f32) * 0.1,   # c1.weight
        jax.random.normal(ks[5], (C2,), f32) * 0.1,            # c1.bias
        jax.random.normal(ks[6], (INTER, IN_FEAT), f32) * 0.1, # l0.weight
        jax.random.normal(ks[7], (INTER,), f32) * 0.1,         # l0.bias
        jax.random.normal(ks[8], (INTER, INTER), f32) * 0.1,   # l1.weight
        jax.random.normal(ks[9], (INTER,), f32) * 0.1,         # l1.bias
        jax.random.normal(ks[10], (1, INTER), f32) * 0.1,      # l2.weight
        jax.random.normal(ks[11], (1,), f32) * 0.1,            # l2.bias
    )

    out = global_discriminator_pallas(E, M, params, INTER)
    out = jax.block_until_ready(out)

    ref = jax.block_until_ready(global_discriminator_ref(E, M, params))
    assert out.shape == (B, 1), out.shape
    assert jnp.allclose(out, ref, rtol=2e-2, atol=2e-2), (out, ref)

    print("KERNEL_OK")
</pallas_src>

<mosaic_0001>
module attributes {stable_mosaic.version = 11 : i64} {
  func.func @_global_disc_kernel(%arg0: memref<2x16xf32, #tpu.memory_space<vmem>>, %arg1: memref<2x512xf32, #tpu.memory_space<vmem>>, %arg2: memref<768x144xbf16, #tpu.memory_space<vmem>>, %arg3: memref<5x144xf32, #tpu.memory_space<vmem>>, %arg4: memref<2x1xf32, #tpu.memory_space<vmem>>) attributes {dimension_semantics = [], scalar_prefetch = 0 : i64, scratch_operands = 0 : i64, tpu.core_type = #tpu.core_type<tc>} {
    %c0 = arith.constant 0 : index
    %c0_0 = arith.constant 0 : index
    %0 = vector.load %arg2[%c0, %c0_0] : memref<768x144xbf16, #tpu.memory_space<vmem>>, vector<512x144xbf16>
    %c512 = arith.constant 512 : index
    %c0_1 = arith.constant 0 : index
    %1 = vector.load %arg2[%c512, %c0_1] : memref<768x144xbf16, #tpu.memory_space<vmem>>, vector<144x32xbf16>
    %c656 = arith.constant 656 : index
    %c0_2 = arith.constant 0 : index
    %2 = vector.load %arg2[%c656, %c0_2] : memref<768x144xbf16, #tpu.memory_space<vmem>>, vector<16x32xbf16>
    %c672 = arith.constant 672 : index
    %c0_3 = arith.constant 0 : index
    %3 = vector.load %arg2[%c672, %c0_3] : memref<768x144xbf16, #tpu.memory_space<vmem>>, vector<32x32xbf16>
    %c704 = arith.constant 704 : index
    %c0_4 = arith.constant 0 : index
    %4 = vector.load %arg2[%c704, %c0_4] : memref<768x144xbf16, #tpu.memory_space<vmem>>, vector<32x32xbf16>
    %c736 = arith.constant 736 : index
    %c0_5 = arith.constant 0 : index
    %5 = vector.load %arg2[%c736, %c0_5] : memref<768x144xbf16, #tpu.memory_space<vmem>>, vector<32x1xbf16>
    %c0_6 = arith.constant 0 : index
    %c0_7 = arith.constant 0 : index
    %6 = vector.load %arg3[%c0_6, %c0_7] : memref<5x144xf32, #tpu.memory_space<vmem>>, vector<1x144xf32>
    %c1 = arith.constant 1 : index
    %c0_8 = arith.constant 0 : index
    %7 = vector.load %arg3[%c1, %c0_8] : memref<5x144xf32, #tpu.memory_space<vmem>>, vector<1x32xf32>
    %c2 = arith.constant 2 : index
    %c0_9 = arith.constant 0 : index
    %8 = vector.load %arg3[%c2, %c0_9] : memref<5x144xf32, #tpu.memory_space<vmem>>, vector<1x32xf32>
    %c3 = arith.constant 3 : index
    %c0_10 = arith.constant 0 : index
    %9 = vector.load %arg3[%c3, %c0_10] : memref<5x144xf32, #tpu.memory_space<vmem>>, vector<1x32xf32>
    %c4 = arith.constant 4 : index
    %c0_11 = arith.constant 0 : index
    %10 = vector.load %arg3[%c4, %c0_11] : memref<5x144xf32, #tpu.memory_space<vmem>>, vector<1x1xf32>
    %c0_12 = arith.constant 0 : index
    %c0_13 = arith.constant 0 : index
    %11 = vector.load %arg1[%c0_12, %c0_13] : memref<2x512xf32, #tpu.memory_space<vmem>>, vector<2x512xf32>
    %12 = arith.truncf %11 : vector<2x512xf32> to vector<2x512xbf16>
    %cst = arith.constant dense<0.000000e+00> : vector<2x144xf32>
    %13 = tpu.matmul %12, %0, %cst {dimension_numbers = #tpu.dot_dimension_numbers<[1], [0], [0], [1], [0, 0, 1, 1], [], []>} : vector<2x512xbf16>, vector<512x144xbf16>, vector<2x144xf32> -> vector<2x144xf32>
    %14 = vector.broadcast %6 : vector<1x144xf32> to vector<2x144xf32>
    %15 = arith.addf %13, %14 : vector<2x144xf32>
    %cst_14 = arith.constant 0.000000e+00 : f32
    %16 = vector.broadcast %cst_14 : f32 to vector<2x144xf32>
    %17 = arith.maximumf %15, %16 : vector<2x144xf32>
    %18 = arith.truncf %17 : vector<2x144xf32> to vector<2x144xbf16>
    %cst_15 = arith.constant dense<0.000000e+00> : vector<2x32xf32>
    %19 = tpu.matmul %18, %1, %cst_15 {dimension_numbers = #tpu.dot_dimension_numbers<[1], [0], [0], [1], [0, 0, 1, 1], [], []>} : vector<2x144xbf16>, vector<144x32xbf16>, vector<2x32xf32> -> vector<2x32xf32>
    %20 = vector.broadcast %7 : vector<1x32xf32> to vector<2x32xf32>
    %21 = arith.addf %19, %20 : vector<2x32xf32>
    %c0_16 = arith.constant 0 : index
    %c0_17 = arith.constant 0 : index
    %22 = vector.load %arg0[%c0_16, %c0_17] : memref<2x16xf32, #tpu.memory_space<vmem>>, vector<2x16xf32>
    %23 = arith.truncf %22 : vector<2x16xf32> to vector<2x16xbf16>
    %cst_18 = arith.constant dense<0.000000e+00> : vector<2x32xf32>
    %24 = tpu.matmul %23, %2, %cst_18 {dimension_numbers = #tpu.dot_dimension_numbers<[1], [0], [0], [1], [0, 0, 1, 1], [], []>} : vector<2x16xbf16>, vector<16x32xbf16>, vector<2x32xf32> -> vector<2x32xf32>
    %25 = arith.truncf %21 : vector<2x32xf32> to vector<2x32xbf16>
    %cst_19 = arith.constant dense<0.000000e+00> : vector<2x32xf32>
    %26 = tpu.matmul %25, %3, %cst_19 {dimension_numbers = #tpu.dot_dimension_numbers<[1], [0], [0], [1], [0, 0, 1, 1], [], []>} : vector<2x32xbf16>, vector<32x32xbf16>, vector<2x32xf32> -> vector<2x32xf32>
    %27 = arith.addf %24, %26 : vector<2x32xf32>
    %28 = vector.broadcast %8 : vector<1x32xf32> to vector<2x32xf32>
    %29 = arith.addf %27, %28 : vector<2x32xf32>
    %cst_20 = arith.constant 0.000000e+00 : f32
    %30 = vector.broadcast %cst_20 : f32 to vector<2x32xf32>
    %31 = arith.maximumf %29, %30 : vector<2x32xf32>
    %32 = arith.truncf %31 : vector<2x32xf32> to vector<2x32xbf16>
    %cst_21 = arith.constant dense<0.000000e+00> : vector<2x32xf32>
    %33 = tpu.matmul %32, %4, %cst_21 {dimension_numbers = #tpu.dot_dimension_numbers<[1], [0], [0], [1], [0, 0, 1, 1], [], []>} : vector<2x32xbf16>, vector<32x32xbf16>, vector<2x32xf32> -> vector<2x32xf32>
    %34 = vector.broadcast %9 : vector<1x32xf32> to vector<2x32xf32>
    %35 = arith.addf %33, %34 : vector<2x32xf32>
    %cst_22 = arith.constant 0.000000e+00 : f32
    %36 = vector.broadcast %cst_22 : f32 to vector<2x32xf32>
    %37 = arith.maximumf %35, %36 : vector<2x32xf32>
    %38 = arith.truncf %37 : vector<2x32xf32> to vector<2x32xbf16>
    %cst_23 = arith.constant dense<0.000000e+00> : vector<2x1xf32>
    %39 = tpu.matmul %38, %5, %cst_23 {dimension_numbers = #tpu.dot_dimension_numbers<[1], [0], [0], [1], [0, 0, 1, 1], [], []>} : vector<2x32xbf16>, vector<32x1xbf16>, vector<2x1xf32> -> vector<2x1xf32>
    %40 = vector.broadcast %10 : vector<1x1xf32> to vector<2x1xf32>
    %41 = arith.addf %39, %40 : vector<2x1xf32>
    %c0_24 = arith.constant 0 : index
    %c0_25 = arith.constant 0 : index
    %42 = vector.load %arg4[%c0_24, %c0_25] : memref<2x1xf32, #tpu.memory_space<vmem>>, vector<2x1xf32>
    tpu.vector_store %arg4[%c0_24, %c0_25], %41 {strides = array<i32>} : memref<2x1xf32, #tpu.memory_space<vmem>>, vector<2x1xf32>,
    return
  }
}

</mosaic_0001>

<llo_original>
// kernel: tpu_custom_call.1
$region0: #{tpu_custom_call.1}
  #allocation0 [shape = 'u32[]', space=smem, size = 0x4, offset = 0x4, fixed_abs, tag = 'smem constant byte address 0x4 - core index']
  #allocation1 [shape = 'u32[72,128]{1,0:T(1,128)}', space=vmem, size = 0x9000, scoped, tag = 'internal scratch']
  %s0 = inlined_call_operand.vmem [shape: f32[2,16], index: 0, kind: input, shape index: {}]
  %s1 = inlined_call_operand.vmem [shape: f32[2,512], index: 1, kind: input, shape index: {}]
  %s2 = inlined_call_operand.vmem [shape: bf16[768,144], index: 2, kind: input, shape index: {}]
  %s3 = inlined_call_operand.vmem [shape: f32[5,144], index: 3, kind: input, shape index: {}]
  %s4 = inlined_call_operand.vmem [shape: f32[2,1], index: 4, kind: output, shape index: {}]
  %s5 = sld [smem:[#allocation0]]
  $region26: #{tpu_custom_call.1} parent=0
    _
  %s7 = ssub.s32 1, %s5
  %s8 = scalar_select 0, %s7, %s5
  // Predicated region
  $region2: #{tpu_custom_call.1} parent=0 // pred_check
    _
  $region3: #{tpu_custom_call.1} parent=0 // pred_check_branch
    %10 = sbr.rel (0) target = $region5
  $region4: #{tpu_custom_call.1} parent=0 // pred_region
    _
  $region5: #{tpu_custom_call.1} parent=0 // pred_fallthru
    _
  // Predicated region
  $region6: #{tpu_custom_call.1} parent=0 // pred_check
    _
  $region7: #{tpu_custom_call.1} parent=0 // pred_check_branch
    %12 = sbr.rel (0) target = $region9
  $region8: #{tpu_custom_call.1} parent=0 // pred_region
    _
  $region9: #{tpu_custom_call.1} parent=0 // pred_fallthru
    _
  // Predicated region
  $region10: #{tpu_custom_call.1} parent=0 // pred_check
    _
  $region11: #{tpu_custom_call.1} parent=0 // pred_check_branch
    %14 = sbr.rel (0) target = $region13
  $region12: #{tpu_custom_call.1} parent=0 // pred_region
    _
  $region13: #{tpu_custom_call.1} parent=0 // pred_fallthru
    _
  // Predicated region
  $region14: #{tpu_custom_call.1} parent=0 // pred_check
    _
  $region15: #{tpu_custom_call.1} parent=0 // pred_check_branch
    %16 = sbr.rel (0) target = $region17
  $region16: #{tpu_custom_call.1} parent=0 // pred_region
    _
  $region17: #{tpu_custom_call.1} parent=0 // pred_fallthru
    _
  %v18 = vld [vmem:[%s2] sm:$0xff]
  %v19 = vld [vmem:[%s2 + $0x8] sm:$0xff]
  %v20 = vld [vmem:[%s2 + $0x10] sm:$0xff]
  %v21 = vld [vmem:[%s2 + $0x18] sm:$0xff]
  %v22 = vld [vmem:[%s2 + $0x20] sm:$0xff]
  %v23 = vld [vmem:[%s2 + $0x28] sm:$0xff]
  %v24 = vld [vmem:[%s2 + $0x30] sm:$0xff]
  %v25 = vld [vmem:[%s2 + $0x38] sm:$0xff]
  %v26 = vld [vmem:[%s2 + $0x40] sm:$0xff]
  %v27 = vld [vmem:[%s2 + $0x48] sm:$0xff]
  %v28 = vld [vmem:[%s2 + $0x50] sm:$0xff]
  %v29 = vld [vmem:[%s2 + $0x58] sm:$0xff]
  %v30 = vld [vmem:[%s2 + $0x60] sm:$0xff]
  %v31 = vld [vmem:[%s2 + $0x68] sm:$0xff]
  %v32 = vld [vmem:[%s2 + $0x70] sm:$0xff]
  %v33 = vld [vmem:[%s2 + $0x78] sm:$0xff]
  %v34 = vld [vmem:[%s2 + $0x80] sm:$0xff]
  %v35 = vld [vmem:[%s2 + $0x88] sm:$0xff]
  %v36 = vld [vmem:[%s2 + $0x90] sm:$0xff]
  %v37 = vld [vmem:[%s2 + $0x98] sm:$0xff]
  %v38 = vld [vmem:[%s2 + $0xa0] sm:$0xff]
  %v39 = vld [vmem:[%s2 + $0xa8] sm:$0xff]
  %v40 = vld [vmem:[%s2 + $0xb0] sm:$0xff]
  %v41 = vld [vmem:[%s2 + $0xb8] sm:$0xff]
  %v42 = vld [vmem:[%s2 + $0xc0] sm:$0xff]
  %v43 = vld [vmem:[%s2 + $0xc8] sm:$0xff]
  %v44 = vld [vmem:[%s2 + $0xd0] sm:$0xff]
  %v45 = vld [vmem:[%s2 + $0xd8] sm:$0xff]
  %v46 = vld [vmem:[%s2 + $0xe0] sm:$0xff]
  %v47 = vld [vmem:[%s2 + $0xe8] sm:$0xff]
  %v48 = vld [vmem:[%s2 + $0xf0] sm:$0xff]
  %v49 = vld [vmem:[%s2 + $0xf8] sm:$0xff]
  %v50 = vld [vmem:[%s2 + $0x100] sm:$0xff]
  %v51 = vld [vmem:[%s2 + $0x108] sm:$0xff]
  %v52 = vld [vmem:[%s2 + $0x110] sm:$0xff]
  %v53 = vld [vmem:[%s2 + $0x118] sm:$0xff]
  %v54 = vld [vmem:[%s2 + $0x120] sm:$0xff]
  %v55 = vld [vmem:[%s2 + $0x128] sm:$0xff]
  %v56 = vld [vmem:[%s2 + $0x130] sm:$0xff]
  %v57 = vld [vmem:[%s2 + $0x138] sm:$0xff]
  %v58 = vld [vmem:[%s2 + $0x140] sm:$0xff]
  %v59 = vld [vmem:[%s2 + $0x148] sm:$0xff]
  %v60 = vld [vmem:[%s2 + $0x150] sm:$0xff]
  %v61 = vld [vmem:[%s2 + $0x158] sm:$0xff]
  %v62 = vld [vmem:[%s2 + $0x160] sm:$0xff]
  %v63 = vld [vmem:[%s2 + $0x168] sm:$0xff]
  %v64 = vld [vmem:[%s2 + $0x170] sm:$0xff]
  %v65 = vld [vmem:[%s2 + $0x178] sm:$0xff]
  %v66 = vld [vmem:[%s2 + $0x180] sm:$0xff]
  %v67 = vld [vmem:[%s2 + $0x188] sm:$0xff]
  %v68 = vld [vmem:[%s2 + $0x190] sm:$0xff]
  %v69 = vld [vmem:[%s2 + $0x198] sm:$0xff]
  %v70 = vld [vmem:[%s2 + $0x1a0] sm:$0xff]
  %v71 = vld [vmem:[%s2 + $0x1a8] sm:$0xff]
  %v72 = vld [vmem:[%s2 + $0x1b0] sm:$0xff]
  %v73 = vld [vmem:[%s2 + $0x1b8] sm:$0xff]
  %v74 = vld [vmem:[%s2 + $0x1c0] sm:$0xff]
  %v75 = vld [vmem:[%s2 + $0x1c8] sm:$0xff]
  %v76 = vld [vmem:[%s2 + $0x1d0] sm:$0xff]
  %v77 = vld [vmem:[%s2 + $0x1d8] sm:$0xff]
  %v78 = vld [vmem:[%s2 + $0x1e0] sm:$0xff]
  %v79 = vld [vmem:[%s2 + $0x1e8] sm:$0xff]
  %v80 = vld [vmem:[%s2 + $0x1f0] sm:$0xff]
  %v81 = vld [vmem:[%s2 + $0x1f8] sm:$0xff]
  %v82 = vld [vmem:[%s2 + $0x200] sm:$0xf]
  %v83 = vld [vmem:[%s2 + $0x208] sm:$0xf]
  %v84 = vld [vmem:[%s2 + $0x210] sm:$0xf]
  %v85 = vld [vmem:[%s2 + $0x218] sm:$0xf]
  %v86 = vld [vmem:[%s2 + $0x220] sm:$0xf]
  %v87 = vld [vmem:[%s2 + $0x228] sm:$0xf]
  %v88 = vld [vmem:[%s2 + $0x230] sm:$0xf]
  %v89 = vld [vmem:[%s2 + $0x238] sm:$0xf]
  %v90 = vld [vmem:[%s2 + $0x240] sm:$0xf]
  %v91 = vld [vmem:[%s2 + $0x248] sm:$0xf]
  %v92 = vld [vmem:[%s2 + $0x250] sm:$0xf]
  %v93 = vld [vmem:[%s2 + $0x258] sm:$0xf]
  %v94 = vld [vmem:[%s2 + $0x260] sm:$0xf]
  %v95 = vld [vmem:[%s2 + $0x268] sm:$0xf]
  %v96 = vld [vmem:[%s2 + $0x270] sm:$0xf]
  %v97 = vld [vmem:[%s2 + $0x278] sm:$0xf]
  %v98 = vld [vmem:[%s2 + $0x280] sm:$0xf]
  %v99 = vld [vmem:[%s2 + $0x288] sm:$0xf]
  %v100 = vld [vmem:[%s2 + $0x290] sm:$0xf]
  %v101 = vld [vmem:[%s2 + $0x298] sm:$0xf]
  %v102 = vld [vmem:[%s2 + $0x2a0] sm:$0xf]
  %v103 = vld [vmem:[%s2 + $0x2a8] sm:$0xf]
  %v104 = vld [vmem:[%s2 + $0x2b0] sm:$0xf]
  %v105 = vld [vmem:[%s2 + $0x2b8] sm:$0xf]
  %v106 = vld [vmem:[%s2 + $0x2c0] sm:$0xf]
  %v107 = vld [vmem:[%s2 + $0x2c8] sm:$0xf]
  %v108 = vld [vmem:[%s2 + $0x2d0] sm:$0xf]
  %v109 = vld [vmem:[%s2 + $0x2d8] sm:$0xf]
  %v110 = vld [vmem:[%s2 + $0x2e0] sm:$0xf]
  %v111 = vld [vmem:[%s2 + $0x2e8] sm:$0xf]
  %v112 = vld [vmem:[%s2 + $0x2f0] sm:$0xf]
  %v113 = vld [vmem:[%s2 + $0x2f8] sm:$0xf]
  %v114 = vld [vmem:[%s3] ss:$8 sm:$0x3]
  %v115 = vld [vmem:[%s3 + $0x1] ss:$0 sm:$0xff]
  %v116 = vld [vmem:[%s3 + $0x2] ss:$0 sm:$0xff]
  %v117 = vld [vmem:[%s3 + $0x3] ss:$0 sm:$0xff]
  %v118 = vld [vmem:[%s3 + $0x4] ss:$0 sm:$0xff]
  %v119 = vld [vmem:[%s1] sm:$0xff]
  %121 = vst [vmem:[#allocation1] ss:$4 sm:$0xff] %v119
  %v122 = vld.sshfl [vmem:[#allocation1] sm:$0xff pattern:$0x73625140]
  %v123 = vld.sshfl [vmem:[#allocation1 + $0x8] sm:$0xff pattern:$0x73625140]
  %v124 = vld.sshfl [vmem:[#allocation1 + $0x10] sm:$0xff pattern:$0x73625140]
  %v125 = vld.sshfl [vmem:[#allocation1 + $0x18] sm:$0xff pattern:$0x73625140]
  %v130 = vpack.c.bf16 %v122, %v122
  %v131 = vpack.c.bf16 %v123, %v123
  %v132 = vpack.c.bf16 %v124, %v124
  %v133 = vpack.c.bf16 %v125, %v125
  %v135 = vperm.slane %v114, 0
  %v136 = vperm.slane %v114, 1
  %v203 = vunpack.c.l.b16 %v18
  %v204 = vunpack.c.h.b16 %v18
  %v205 = vunpack.c.l.b16 %v19
  %v206 = vunpack.c.h.b16 %v19
  %v207 = vunpack.c.l.b16 %v20
  %v208 = vunpack.c.h.b16 %v20
  %v209 = vunpack.c.l.b16 %v21
  %v210 = vunpack.c.h.b16 %v21
  %v211 = vunpack.c.l.b16 %v22
  %v212 = vunpack.c.h.b16 %v22
  %v213 = vunpack.c.l.b16 %v23
  %v214 = vunpack.c.h.b16 %v23
  %v215 = vunpack.c.l.b16 %v24
  %v216 = vunpack.c.h.b16 %v24
  %v217 = vunpack.c.l.b16 %v25
  %v218 = vunpack.c.h.b16 %v25
  %v219 = vunpack.c.l.b16 %v26
  %v220 = vunpack.c.h.b16 %v26
  %v221 = vunpack.c.l.b16 %v27
  %v222 = vunpack.c.h.b16 %v27
  %v223 = vunpack.c.l.b16 %v28
  %v224 = vunpack.c.h.b16 %v28
  %v225 = vunpack.c.l.b16 %v29
  %v226 = vunpack.c.h.b16 %v29
  %v227 = vunpack.c.l.b16 %v30
  %v228 = vunpack.c.h.b16 %v30
  %v229 = vunpack.c.l.b16 %v31
  %v230 = vunpack.c.h.b16 %v31
  %v231 = vunpack.c.l.b16 %v32
  %v232 = vunpack.c.h.b16 %v32
  %v233 = vunpack.c.l.b16 %v33
  %v234 = vunpack.c.h.b16 %v33
  %v235 = vunpack.c.l.b16 %v34
  %v236 = vunpack.c.h.b16 %v34
  %v237 = vunpack.c.l.b16 %v35
  %v238 = vunpack.c.h.b16 %v35
  %v239 = vunpack.c.l.b16 %v36
  %v240 = vunpack.c.h.b16 %v36
  %v241 = vunpack.c.l.b16 %v37
  %v242 = vunpack.c.h.b16 %v37
  %v243 = vunpack.c.l.b16 %v38
  %v244 = vunpack.c.h.b16 %v38
  %v245 = vunpack.c.l.b16 %v39
  %v246 = vunpack.c.h.b16 %v39
  %v247 = vunpack.c.l.b16 %v40
  %v248 = vunpack.c.h.b16 %v40
  %v249 = vunpack.c.l.b16 %v41
  %v250 = vunpack.c.h.b16 %v41
  %v251 = vunpack.c.l.b16 %v42
  %v252 = vunpack.c.h.b16 %v42
  %v253 = vunpack.c.l.b16 %v43
  %v254 = vunpack.c.h.b16 %v43
  %v255 = vunpack.c.l.b16 %v44
  %v256 = vunpack.c.h.b16 %v44
  %v257 = vunpack.c.l.b16 %v45
  %v258 = vunpack.c.h.b16 %v45
  %v259 = vunpack.c.l.b16 %v46
  %v260 = vunpack.c.h.b16 %v46
  %v261 = vunpack.c.l.b16 %v47
  %v262 = vunpack.c.h.b16 %v47
  %v263 = vunpack.c.l.b16 %v48
  %v264 = vunpack.c.h.b16 %v48
  %v265 = vunpack.c.l.b16 %v49
  %v266 = vunpack.c.h.b16 %v49
  %v267 = vunpack.c.l.b16 %v50
  %v268 = vunpack.c.h.b16 %v50
  %v269 = vunpack.c.l.b16 %v51
  %v270 = vunpack.c.h.b16 %v51
  %v271 = vunpack.c.l.b16 %v52
  %v272 = vunpack.c.h.b16 %v52
  %v273 = vunpack.c.l.b16 %v53
  %v274 = vunpack.c.h.b16 %v53
  %v275 = vunpack.c.l.b16 %v54
  %v276 = vunpack.c.h.b16 %v54
  %v277 = vunpack.c.l.b16 %v55
  %v278 = vunpack.c.h.b16 %v55
  %v279 = vunpack.c.l.b16 %v56
  %v280 = vunpack.c.h.b16 %v56
  %v281 = vunpack.c.l.b16 %v57
  %v282 = vunpack.c.h.b16 %v57
  %v283 = vunpack.c.l.b16 %v58
  %v284 = vunpack.c.h.b16 %v58
  %v285 = vunpack.c.l.b16 %v59
  %v286 = vunpack.c.h.b16 %v59
  %v287 = vunpack.c.l.b16 %v60
  %v288 = vunpack.c.h.b16 %v60
  %v289 = vunpack.c.l.b16 %v61
  %v290 = vunpack.c.h.b16 %v61
  %v291 = vunpack.c.l.b16 %v62
  %v292 = vunpack.c.h.b16 %v62
  %v293 = vunpack.c.l.b16 %v63
  %v294 = vunpack.c.h.b16 %v63
  %v295 = vunpack.c.l.b16 %v64
  %v296 = vunpack.c.h.b16 %v64
  %v297 = vunpack.c.l.b16 %v65
  %v298 = vunpack.c.h.b16 %v65
  %v299 = vunpack.c.l.b16 %v66
  %v300 = vunpack.c.h.b16 %v66
  %v301 = vunpack.c.l.b16 %v67
  %v302 = vunpack.c.h.b16 %v67
  %v303 = vunpack.c.l.b16 %v68
  %v304 = vunpack.c.h.b16 %v68
  %v305 = vunpack.c.l.b16 %v69
  %v306 = vunpack.c.h.b16 %v69
  %v307 = vunpack.c.l.b16 %v70
  %v308 = vunpack.c.h.b16 %v70
  %v309 = vunpack.c.l.b16 %v71
  %v310 = vunpack.c.h.b16 %v71
  %v311 = vunpack.c.l.b16 %v72
  %v312 = vunpack.c.h.b16 %v72
  %v313 = vunpack.c.l.b16 %v73
  %v314 = vunpack.c.h.b16 %v73
  %v315 = vunpack.c.l.b16 %v74
  %v316 = vunpack.c.h.b16 %v74
  %v317 = vunpack.c.l.b16 %v75
  %v318 = vunpack.c.h.b16 %v75
  %v319 = vunpack.c.l.b16 %v76
  %v320 = vunpack.c.h.b16 %v76
  %v321 = vunpack.c.l.b16 %v77
  %v322 = vunpack.c.h.b16 %v77
  %v323 = vunpack.c.l.b16 %v78
  %v324 = vunpack.c.h.b16 %v78
  %v325 = vunpack.c.l.b16 %v79
  %v326 = vunpack.c.h.b16 %v79
  %v327 = vunpack.c.l.b16 %v80
  %v328 = vunpack.c.h.b16 %v80
  %v329 = vunpack.c.l.b16 %v81
  %v330 = vunpack.c.h.b16 %v81
  %v331 = vpack.c.b16 %v205, %v203
  %v332 = vpack.c.b16 %v206, %v204
  %v333 = vpack.c.b16 %v209, %v207
  %v334 = vpack.c.b16 %v210, %v208
  %v335 = vpack.c.b16 %v213, %v211
  %v336 = vpack.c.b16 %v214, %v212
  %v337 = vpack.c.b16 %v217, %v215
  %v338 = vpack.c.b16 %v218, %v216
  %v339 = vpack.c.b16 %v221, %v219
  %v340 = vpack.c.b16 %v222, %v220
  %v341 = vpack.c.b16 %v225, %v223
  %v342 = vpack.c.b16 %v226, %v224
  %v343 = vpack.c.b16 %v229, %v227
  %v344 = vpack.c.b16 %v230, %v228
  %v345 = vpack.c.b16 %v233, %v231
  %v346 = vpack.c.b16 %v234, %v232
  %v347 = vpack.c.b16 %v237, %v235
  %v348 = vpack.c.b16 %v238, %v236
  %v349 = vpack.c.b16 %v241, %v239
  %v350 = vpack.c.b16 %v242, %v240
  %v351 = vpack.c.b16 %v245, %v243
  %v352 = vpack.c.b16 %v246, %v244
  %v353 = vpack.c.b16 %v249, %v247
  %v354 = vpack.c.b16 %v250, %v248
  %v355 = vpack.c.b16 %v253, %v251
  %v356 = vpack.c.b16 %v254, %v252
  %v357 = vpack.c.b16 %v257, %v255
  %v358 = vpack.c.b16 %v258, %v256
  %v359 = vpack.c.b16 %v261, %v259
  %v360 = vpack.c.b16 %v262, %v260
  %v361 = vpack.c.b16 %v265, %v263
  %v362 = vpack.c.b16 %v266, %v264
  %v363 = vpack.c.b16 %v269, %v267
  %v364 = vpack.c.b16 %v270, %v268
  %v365 = vpack.c.b16 %v273, %v271
  %v366 = vpack.c.b16 %v274, %v272
  %v367 = vpack.c.b16 %v277, %v275
  %v368 = vpack.c.b16 %v278, %v276
  %v369 = vpack.c.b16 %v281, %v279
  %v370 = vpack.c.b16 %v282, %v280
  %v371 = vpack.c.b16 %v285, %v283
  %v372 = vpack.c.b16 %v286, %v284
  %v373 = vpack.c.b16 %v289, %v287
  %v374 = vpack.c.b16 %v290, %v288
  %v375 = vpack.c.b16 %v293, %v291
  %v376 = vpack.c.b16 %v294, %v292
  %v377 = vpack.c.b16 %v297, %v295
  %v378 = vpack.c.b16 %v298, %v296
  %v379 = vpack.c.b16 %v301, %v299
  %v380 = vpack.c.b16 %v302, %v300
  %v381 = vpack.c.b16 %v305, %v303
  %v382 = vpack.c.b16 %v306, %v304
  %v383 = vpack.c.b16 %v309, %v307
  %v384 = vpack.c.b16 %v310, %v308
  %v385 = vpack.c.b16 %v313, %v311
  %v386 = vpack.c.b16 %v314, %v312
  %v387 = vpack.c.b16 %v317, %v315
  %v388 = vpack.c.b16 %v318, %v316
  %v389 = vpack.c.b16 %v321, %v319
  %v390 = vpack.c.b16 %v322, %v320
  %v391 = vpack.c.b16 %v325, %v323
  %v392 = vpack.c.b16 %v326, %v324
  %v393 = vpack.c.b16 %v329, %v327
  %v394 = vpack.c.b16 %v330, %v328
  %459 = vmatpush.bf16.msra.mxu0 %v345
  %460 = vmatpush.bf16.msra.mxu0 %v343
  %461 = vmatpush.bf16.msra.mxu0 %v341
  %462 = vmatpush.bf16.msra.mxu0 %v339
  %463 = vmatpush.bf16.msra.mxu0 %v337
  %464 = vmatpush.bf16.msra.mxu0 %v335
  %465 = vmatpush.bf16.msra.mxu0 %v333
  %466 = vmatpush.bf16.msra.mxu0 %v331
  %467 = vmatmul.bf16.gmra.mxu0 %v130
  %v468 = vpop.f32.mrf.mxu0
  %v469 = vadd.f32 %v135, %v468
  %v470 = vpop.f32.mrf.mxu0
  %471 = vdwg.mxu0
  %472 = vmatpush.bf16.msra.mxu0 %v361
  %473 = vmatpush.bf16.msra.mxu0 %v359
  %474 = vmatpush.bf16.msra.mxu0 %v357
  %475 = vmatpush.bf16.msra.mxu0 %v355
  %476 = vmatpush.bf16.msra.mxu0 %v353
  %477 = vmatpush.bf16.msra.mxu0 %v351
  %478 = vmatpush.bf16.msra.mxu0 %v349
  %479 = vmatpush.bf16.msra.mxu0 %v347
  %480 = vmatmul.bf16.gmra.mxu0 %v131
  %v481 = vpop.f32.mrf.mxu0
  %v482 = vadd.f32 %v469, %v481
  %v483 = vpop.f32.mrf.mxu0
  %484 = vdwg.mxu0
  %485 = vmatpush.bf16.msra.mxu0 %v377
  %486 = vmatpush.bf16.msra.mxu0 %v375
  %487 = vmatpush.bf16.msra.mxu0 %v373
  %488 = vmatpush.bf16.msra.mxu0 %v371
  %489 = vmatpush.bf16.msra.mxu0 %v369
  %490 = vmatpush.bf16.msra.mxu0 %v367
  %491 = vmatpush.bf16.msra.mxu0 %v365
  %492 = vmatpush.bf16.msra.mxu0 %v363
  %493 = vmatmul.bf16.gmra.mxu0 %v132
  %v494 = vpop.f32.mrf.mxu0
  %v495 = vadd.f32 %v482, %v494
  %v496 = vpop.f32.mrf.mxu0
  %497 = vdwg.mxu0
  %498 = vmatpush.bf16.msra.mxu0 %v393
  %499 = vmatpush.bf16.msra.mxu0 %v391
  %500 = vmatpush.bf16.msra.mxu0 %v389
  %501 = vmatpush.bf16.msra.mxu0 %v387
  %502 = vmatpush.bf16.msra.mxu0 %v385
  %503 = vmatpush.bf16.msra.mxu0 %v383
  %504 = vmatpush.bf16.msra.mxu0 %v381
  %505 = vmatpush.bf16.msra.mxu0 %v379
  %506 = vmatmul.bf16.gmra.mxu0 %v133
  %v507 = vpop.f32.mrf.mxu0
  %v508 = vadd.f32 %v495, %v507
  %v509 = vpop.f32.mrf.mxu0
  %510 = vdwg.mxu0
  %511 = vmatpush.bf16.msra.mxu0 %v346
  %512 = vmatpush.bf16.msra.mxu0 %v344
  %513 = vmatpush.bf16.msra.mxu0 %v342
  %514 = vmatpush.bf16.msra.mxu0 %v340
  %515 = vmatpush.bf16.msra.mxu0 %v338
  %516 = vmatpush.bf16.msra.mxu0 %v336
  %517 = vmatpush.bf16.msra.mxu0 %v334
  %518 = vmatpush.bf16.msra.mxu0 %v332
  %519 = vmatmul.bf16.gmra.mxu0 %v130
  %v520 = vpop.f32.mrf.mxu0
  %v521 = vadd.f32 %v136, %v520
  %v522 = vpop.f32.mrf.mxu0
  %523 = vdwg.mxu0
  %524 = vmatpush.bf16.msra.mxu0 %v362
  %525 = vmatpush.bf16.msra.mxu0 %v360
  %526 = vmatpush.bf16.msra.mxu0 %v358
  %527 = vmatpush.bf16.msra.mxu0 %v356
  %528 = vmatpush.bf16.msra.mxu0 %v354
  %529 = vmatpush.bf16.msra.mxu0 %v352
  %530 = vmatpush.bf16.msra.mxu0 %v350
  %531 = vmatpush.bf16.msra.mxu0 %v348
  %532 = vmatmul.bf16.gmra.mxu0 %v131
  %v533 = vpop.f32.mrf.mxu0
  %v534 = vadd.f32 %v521, %v533
  %v535 = vpop.f32.mrf.mxu0
  %536 = vdwg.mxu0
  %537 = vmatpush.bf16.msra.mxu0 %v378
  %538 = vmatpush.bf16.msra.mxu0 %v376
  %539 = vmatpush.bf16.msra.mxu0 %v374
  %540 = vmatpush.bf16.msra.mxu0 %v372
  %541 = vmatpush.bf16.msra.mxu0 %v370
  %542 = vmatpush.bf16.msra.mxu0 %v368
  %543 = vmatpush.bf16.msra.mxu0 %v366
  %544 = vmatpush.bf16.msra.mxu0 %v364
  %545 = vmatmul.bf16.gmra.mxu0 %v132
  %v546 = vpop.f32.mrf.mxu0
  %v547 = vadd.f32 %v534, %v546
  %v548 = vpop.f32.mrf.mxu0
  %549 = vdwg.mxu0
  %550 = vmatpush.bf16.msra.mxu0 %v394
  %551 = vmatpush.bf16.msra.mxu0 %v392
  %552 = vmatpush.bf16.msra.mxu0 %v390
  %553 = vmatpush.bf16.msra.mxu0 %v388
  %554 = vmatpush.bf16.msra.mxu0 %v386
  %555 = vmatpush.bf16.msra.mxu0 %v384
  %556 = vmatpush.bf16.msra.mxu0 %v382
  %557 = vmatpush.bf16.msra.mxu0 %v380
  %558 = vmatmul.bf16.gmra.mxu0 %v133
  %v559 = vpop.f32.mrf.mxu0
  %v560 = vadd.f32 %v547, %v559
  %v561 = vpop.f32.mrf.mxu0
  %562 = vdwg.mxu0
  %v563 = vmax.f32 %v508, 0.0
  %v564 = vmax.f32 %v560, 0.0
  %v565 = vpack.c.bf16 %v563, %v563
  %v566 = vpack.c.bf16 %v564, %v564
  %v585 = vunpack.c.l.b16 %v82
  %v586 = vunpack.c.l.b16 %v83
  %v587 = vunpack.c.l.b16 %v84
  %v588 = vunpack.c.l.b16 %v85
  %v589 = vunpack.c.l.b16 %v86
  %v590 = vunpack.c.l.b16 %v87
  %v591 = vunpack.c.l.b16 %v88
  %v592 = vunpack.c.l.b16 %v89
  %v593 = vunpack.c.l.b16 %v90
  %v594 = vunpack.c.l.b16 %v91
  %v595 = vunpack.c.l.b16 %v92
  %v596 = vunpack.c.l.b16 %v93
  %v597 = vunpack.c.l.b16 %v94
  %v598 = vunpack.c.l.b16 %v95
  %v599 = vunpack.c.l.b16 %v96
  %v600 = vunpack.c.l.b16 %v97
  %v601 = vunpack.c.l.b16 %v98
  %v602 = vunpack.c.l.b16 %v99
  %v603 = vpack.c.b16 %v586, %v585
  %v604 = vpack.c.b16 %v588, %v587
  %v605 = vpack.c.b16 %v590, %v589
  %v606 = vpack.c.b16 %v592, %v591
  %v607 = vpack.c.b16 %v594, %v593
  %v608 = vpack.c.b16 %v596, %v595
  %v609 = vpack.c.b16 %v598, %v597
  %v610 = vpack.c.b16 %v600, %v599
  %v611 = vpack.c.b16 %v602, %v601
  %vm621 = vcmask 130048
  %v623 = vsel %vm621, %v566, 0
  %625 = vmatpush.bf16.msra.mxu0 %v610
  %626 = vmatpush.bf16.msra.mxu0 %v609
  %627 = vmatpush.bf16.msra.mxu0 %v608
  %628 = vmatpush.bf16.msra.mxu0 %v607
  %629 = vmatpush.bf16.msra.mxu0 %v606
  %630 = vmatpush.bf16.msra.mxu0 %v605
  %631 = vmatpush.bf16.msra.mxu0 %v604
  %632 = vmatpush.bf16.msra.mxu0 %v603
  %633 = vmatmul.bf16.gmra.mxu0 %v565
  %v634 = vpop.f32.mrf.mxu0
  %v635 = vadd.f32 %v115, %v634
  %v636 = vpop.f32.mrf.mxu0
  %637 = vdwg.mxu0
  %638 = vmatpush.bf16.msra.mxu0 0
  %639 = vmatpush.bf16.msra.mxu0 0
  %640 = vmatpush.bf16.msra.mxu0 0
  %641 = vmatpush.bf16.msra.mxu0 0
  %642 = vmatpush.bf16.msra.mxu0 0
  %643 = vmatpush.bf16.msra.mxu0 0
  %644 = vmatpush.bf16.msra.mxu0 0
  %645 = vmatpush.bf16.msra.mxu0 %v611
  %646 = vmatmul.bf16.gmra.mxu0 %v623
  %v647 = vpop.f32.mrf.mxu0
  %v648 = vadd.f32 %v635, %v647
  %v649 = vpop.f32.mrf.mxu0
  %650 = vdwg.mxu0
  %v651 = vld [vmem:[%s0] sm:$0x3]
  %v652 = vpack.c.bf16 %v651, %v651
  %v653 = vpack.c.bf16 %v648, %v648
  %v658 = vunpack.c.l.b16 %v102
  %v659 = vunpack.c.l.b16 %v103
  %v660 = vunpack.c.l.b16 %v104
  %v661 = vunpack.c.l.b16 %v105
  %v662 = vpack.c.b16 %v659, %v658
  %v663 = vpack.c.b16 %v661, %v660
  %vm666 = vcmask 261120
  %v668 = vsel %vm666, %v653, 0
  %670 = vmatpush.bf16.msra.mxu0 0
  %671 = vmatpush.bf16.msra.mxu0 0
  %672 = vmatpush.bf16.msra.mxu0 0
  %673 = vmatpush.bf16.msra.mxu0 0
  %674 = vmatpush.bf16.msra.mxu0 0
  %675 = vmatpush.bf16.msra.mxu0 0
  %676 = vmatpush.bf16.msra.mxu0 %v663
  %677 = vmatpush.bf16.msra.mxu0 %v662
  %678 = vmatmul.bf16.gmra.mxu0 %v668
  %v679 = vpop.f32.mrf.mxu0
  %v680 = vadd.f32 0.0, %v679
  %v681 = vpop.f32.mrf.mxu0
  %682 = vdwg.mxu0
  %v685 = vunpack.c.l.b16 %v100
  %v686 = vunpack.c.l.b16 %v101
  %v687 = vpack.c.b16 %v686, %v685
  %v690 = vsel %vm621, %v652, 0
  %692 = vmatpush.bf16.msra.mxu0 0
  %693 = vmatpush.bf16.msra.mxu0 0
  %694 = vmatpush.bf16.msra.mxu0 0
  %695 = vmatpush.bf16.msra.mxu0 0
  %696 = vmatpush.bf16.msra.mxu0 0
  %697 = vmatpush.bf16.msra.mxu0 0
  %698 = vmatpush.bf16.msra.mxu0 0
  %699 = vmatpush.bf16.msra.mxu0 %v687
  %700 = vmatmul.bf16.gmra.mxu0 %v690
  %v701 = vpop.f32.mrf.mxu0
  %v702 = vadd.f32 %v680, %v701
  %v703 = vpop.f32.mrf.mxu0
  %704 = vdwg.mxu0
  %v705 = vadd.f32 %v702, %v116
  %v706 = vmax.f32 %v705, 0.0
  %v707 = vpack.c.bf16 %v706, %v706
  %v712 = vunpack.c.l.b16 %v106
  %v713 = vunpack.c.l.b16 %v107
  %v714 = vunpack.c.l.b16 %v108
  %v715 = vunpack.c.l.b16 %v109
  %v716 = vpack.c.b16 %v713, %v712
  %v717 = vpack.c.b16 %v715, %v714
  %v721 = vsel %vm666, %v707, 0
  %723 = vmatpush.bf16.msra.mxu0 0
  %724 = vmatpush.bf16.msra.mxu0 0
  %725 = vmatpush.bf16.msra.mxu0 0
  %726 = vmatpush.bf16.msra.mxu0 0
  %727 = vmatpush.bf16.msra.mxu0 0
  %728 = vmatpush.bf16.msra.mxu0 0
  %729 = vmatpush.bf16.msra.mxu0 %v717
  %730 = vmatpush.bf16.msra.mxu0 %v716
  %731 = vmatmul.bf16.gmra.mxu0 %v721
  %v732 = vpop.f32.mrf.mxu0
  %v733 = vadd.f32 %v117, %v732
  %v734 = vpop.f32.mrf.mxu0
  %735 = vdwg.mxu0
  %v736 = vmax.f32 %v733, 0.0
  %v737 = vpack.c.bf16 %v736, %v736
  %v742 = vunpack.c.l.b16 %v110
  %v743 = vunpack.c.l.b16 %v111
  %v744 = vunpack.c.l.b16 %v112
  %v745 = vunpack.c.l.b16 %v113
  %v746 = vpack.c.b16 %v743, %v742
  %v747 = vpack.c.b16 %v745, %v744
  %v751 = vsel %vm666, %v737, 0
  %753 = vmatpush.bf16.msra.mxu0 0
  %754 = vmatpush.bf16.msra.mxu0 0
  %755 = vmatpush.bf16.msra.mxu0 0
  %756 = vmatpush.bf16.msra.mxu0 0
  %757 = vmatpush.bf16.msra.mxu0 0
  %758 = vmatpush.bf16.msra.mxu0 0
  %759 = vmatpush.bf16.msra.mxu0 %v747
  %760 = vmatpush.bf16.msra.mxu0 %v746
  %761 = vmatmul.bf16.gmra.mxu0 %v751
  %v762 = vpop.f32.mrf.mxu0
  %v763 = vadd.f32 %v118, %v762
  %v764 = vpop.f32.mrf.mxu0
  %765 = vdwg.mxu0
  %vm766 = vcmask 1024
  %767 = vst.msk [vmem:[%s4] sm:$0x3] %vm766, %v763
  // Predicated region
  $region18: #{tpu_custom_call.1} parent=0 // pred_check
    _
  $region19: #{tpu_custom_call.1} parent=0 // pred_check_branch
    %769 = sbr.rel (0) target = $region21
  $region20: #{tpu_custom_call.1} parent=0 // pred_region
    _
  $region21: #{tpu_custom_call.1} parent=0 // pred_fallthru
    _
  // Predicated region
  $region22: #{tpu_custom_call.1} parent=0 // pred_check
    _
  $region23: #{tpu_custom_call.1} parent=0 // pred_check_branch
    %771 = sbr.rel (0) target = $region25
  $region24: #{tpu_custom_call.1} parent=0 // pred_region
    _
  $region25: #{tpu_custom_call.1} parent=0 // pred_fallthru
    _

</llo_original>
